<compile_context>
chip_gen: v6e
topology: v6e:2x2x1
jax: 0.10.0
libtpu: 0.0.40
codegen_flags: <defaults>
</compile_context>

<pallas_src>
import jax
import jax.numpy as jnp
from jax.experimental import pallas as pl
from jax.experimental.pallas import tpu as pltpu


def gru_model_kernel(x_ref, wg_ref, bg_ref, wh_ref, bh_ref, sig_ref, skip_ref):
    """One grid block = one tile of `block_n` rows of N.  All refs are VMEM tiles.

    x_ref    : (bn, T, H)       embedded random walks (f32 or bf16)
    wg_ref   : (H, 2*L*H)       concatenated gate weights [ir_0|..|ir_{L-1}|iz_0|..|iz_{L-1}]
    bg_ref   : (1, 2*L*H)       concatenated gate biases (f32)
    wh_ref   : (H, O+1)         fused head weights [W_skip^T | W_lin^T]
    bh_ref   : (1, O+1)         fused head biases
    sig_ref  : (bn, 1)   out    sigmoid(Linear(hn))
    skip_ref : (bn, O)   out    F.linear(hn, W_skip, b_skip)
    """
    bn, T, H = x_ref.shape
    G = wg_ref.shape[1]
    L = G // (2 * H)
    O = skip_ref.shape[1]

    # ---- (1) hoisted, lane-dense gate matmul: one (bn*T, H) @ (H, 2*L*H) ----
    x2 = x_ref[...].reshape(bn * T, H)
    gates = jnp.dot(x2, wg_ref[...], preferred_element_type=jnp.float32)
    gates = (gates + bg_ref[...]).reshape(bn, T, G)

    # ---- (2) hoisted sigmoids: all z-gates in one EUP pass -------------------
    h_all = gates[:, :, : L * H]                    # (bn, T, L*H)
    z_all = jax.nn.sigmoid(gates[:, :, L * H:])     # (bn, T, L*H)

    # ---- serial recurrence: register-carried hn, pure VPU blends -------------
    # NOTE: for large T switch this static unroll to lax.fori_loop(..., unroll=True)
    # over t with hn as the carry (gate slabs read from a VMEM scratch).
    hn = jnp.zeros((bn, H), jnp.float32)
    for l in range(L):
        off = l * H
        for t in range(T):
            h_t = h_all[:, t, off:off + H]
            z_t = z_all[:, t, off:off + H]
            hn = (1.0 - z_t) * hn + z_t * h_t

    # ---- (3) fused head: one matmul for [skip | linear], sigmoid on last col --
    head = jnp.dot(hn, wh_ref[...], preferred_element_type=jnp.float32) + bh_ref[...]
    skip_ref[...] = head[:, :O]
    sig_ref[...] = jax.nn.sigmoid(head[:, O:O + 1])


def gru_model_forward(node_walk_idx, edge_label_index, params,
                      *, matmul_dtype=jnp.float32, block_n=None):
    """Equivalent of GRUModel.forward(graph).

    node_walk_idx    : (N, T) int32   graph.random_walk_node2vec_f
    edge_label_index : (2, E) int32   graph.edge_label_index
    matmul_dtype     : jnp.float32 (default / v5e) or jnp.bfloat16 (v6e / v7x MXU).
    Returns (pred (E,), skip_out (N, O)).
    """
    # --- glue: embedding lookup ------------------------------------------------
    x = jnp.take(params["emb"], node_walk_idx, axis=0).astype(jnp.float32)  # (N, T, H)
    N, T, H = x.shape
    L = params["w_ir"].shape[0]
    O = params["w_skip"].shape[0]

    # --- build fused operands (all column-blocks are independent dot products,
    #     so results are bit-identical to the per-layer matmuls) ----------------
    wirT = jnp.transpose(params["w_ir"], (0, 2, 1))                   # (L, H, H)
    wizT = jnp.transpose(params["w_iz"], (0, 2, 1))                   # (L, H, H)
    w_gates = jnp.concatenate([wirT[l] for l in range(L)]
                              + [wizT[l] for l in range(L)], axis=1)  # (H, 2*L*H)
    b_gates = jnp.concatenate([params["b_ir"].reshape(-1),
                               params["b_iz"].reshape(-1)])[None, :]  # (1, 2*L*H)
    w_head = jnp.concatenate([params["w_skip"].T,
                              params["w_lin"].T], axis=1)             # (H, O+1)
    b_head = jnp.concatenate([params["b_skip"],
                              params["b_lin"]])[None, :]              # (1, O+1)

    x_mm = x.astype(matmul_dtype)
    w_gates = w_gates.astype(matmul_dtype)

    # --- grid over N (parallel across TensorCores; pipelines x HBM->VMEM) ------
    if block_n is None:
        block_n = N if N <= 256 else 256
    if N % block_n != 0 or (block_n < N and block_n % 8 != 0):
        block_n = N                                  # fall back to a single block
    grid = (N // block_n,)

    vmem_bcast = lambda shape: pl.BlockSpec(shape, lambda i: (0,) * len(shape))
    sig_out, skip_out = pl.pallas_call(
        gru_model_kernel,
        out_shape=(jax.ShapeDtypeStruct((N, 1), jnp.float32),
                   jax.ShapeDtypeStruct((N, O), jnp.float32)),
        grid=grid,
        in_specs=[
            pl.BlockSpec((block_n, T, H), lambda i: (i, 0, 0)),       # x tile
            vmem_bcast((H, 2 * L * H)),                               # gate weights
            vmem_bcast((1, 2 * L * H)),                               # gate biases
            vmem_bcast((H, O + 1)),                                   # head weights
            vmem_bcast((1, O + 1)),                                   # head biases
        ],
        out_specs=(pl.BlockSpec((block_n, 1), lambda i: (i, 0)),
                   pl.BlockSpec((block_n, O), lambda i: (i, 0))),
        compiler_params=pltpu.CompilerParams(dimension_semantics=("parallel",)),
    )(x_mm, w_gates, b_gates, w_head, b_head)

    # --- glue: edge decoding ('dot'): gather node features, sum(v1*v2, -1) -----
    node_feat = sig_out[edge_label_index]                 # (2, E, 1)
    pred = jnp.sum(node_feat[0] * node_feat[1], axis=-1)  # (E,)
    return pred, skip_out


def gru_model_reference(node_walk_idx, edge_label_index, params):
    """Pure-JAX reference mirroring the torch forward (dropout is dead code)."""
    x = jnp.take(params["emb"], node_walk_idx, axis=0).astype(jnp.float32)
    N, T, H = x.shape
    L = params["w_ir"].shape[0]
    hn = jnp.zeros((N, H), jnp.float32)
    for l in range(L):
        for t in range(T):
            x1 = x[:, t, :]
            h_t = x1 @ params["w_ir"][l].T + params["b_ir"][l]
            z_t = jax.nn.sigmoid(x1 @ params["w_iz"][l].T + params["b_iz"][l])
            hn = (1.0 - z_t) * hn + z_t * h_t
    sig = jax.nn.sigmoid(hn @ params["w_lin"].T + params["b_lin"])
    skip = hn @ params["w_skip"].T + params["b_skip"]
    nf = sig[edge_label_index]
    pred = jnp.sum(nf[0] * nf[1], axis=-1)
    return pred, skip


def init_params(key, input_dim, hidden_dim, output_dim, num_layer):
    # NOTE: the torch forward only shape-checks when output_dim == hidden_dim
    # (layer i>0 has (output_dim, output_dim) weights applied to hidden_dim inputs).
    assert output_dim == hidden_dim
    H, O, L = hidden_dim, output_dim, num_layer
    ks = jax.random.split(key, 8)
    gain = jnp.sqrt(2.0)                                   # calculate_gain('relu')
    xavier_std = gain * jnp.sqrt(2.0 / (H + H))            # xavier_normal_
    return {
        "w_ir": xavier_std * jax.random.normal(ks[0], (L, H, H), jnp.float32),
        "b_ir": jnp.ones((L, H), jnp.float32),
        "w_iz": xavier_std * jax.random.normal(ks[1], (L, H, H), jnp.float32),
        "b_iz": jnp.ones((L, H), jnp.float32),
        "emb": jax.random.normal(ks[2], (input_dim, H), jnp.float32),
        "w_lin": jax.random.uniform(ks[3], (1, H), jnp.float32,
                                    -1.0 / jnp.sqrt(H), 1.0 / jnp.sqrt(H)),
        "b_lin": jax.random.uniform(ks[4], (1,), jnp.float32,
                                    -1.0 / jnp.sqrt(H), 1.0 / jnp.sqrt(H)),
        "w_skip": jax.random.uniform(ks[5], (O, H), jnp.float32),   # torch.rand
        "b_skip": jax.random.uniform(ks[6], (O,), jnp.float32),     # torch.rand
    }


if __name__ == "__main__":
    input_dim = 16    # embedding vocabulary size
    hidden_dim = 32
    output_dim = 32   # must equal hidden_dim for the reference forward to be consistent
    num_layer = 2
    N, T, E = 8, 8, 6

    key = jax.random.PRNGKey(0)
    kp, kw, ke = jax.random.split(key, 3)
    params = init_params(kp, input_dim, hidden_dim, output_dim, num_layer)
    node_walk_idx = jax.random.randint(kw, (N, T), 0, input_dim, dtype=jnp.int32)
    edge_label_index = jax.random.randint(ke, (2, E), 0, N, dtype=jnp.int32)

    pred, skip_out = jax.jit(gru_model_forward)(node_walk_idx, edge_label_index, params)
    jax.block_until_ready((pred, skip_out))
    assert pred.shape == (E,)
    assert skip_out.shape == (N, output_dim)

    # correctness vs. pure-JAX reference of the torch forward
    pred_ref, skip_ref = jax.jit(gru_model_reference)(node_walk_idx, edge_label_index, params)
    assert jnp.allclose(pred, pred_ref, rtol=2e-2, atol=2e-2)
    assert jnp.allclose(skip_out, skip_ref, rtol=2e-2, atol=2e-2)

    print("KERNEL_OK")
</pallas_src>

<mosaic_0001>
module attributes {stable_mosaic.version = 11 : i64} {
  func.func @gru_model_kernel(%arg0: i32, %arg1: memref<8x8x32xf32, #tpu.memory_space<vmem>>, %arg2: memref<32x128xf32, #tpu.memory_space<vmem>>, %arg3: memref<1x128xf32, #tpu.memory_space<vmem>>, %arg4: memref<32x33xf32, #tpu.memory_space<vmem>>, %arg5: memref<1x33xf32, #tpu.memory_space<vmem>>, %arg6: memref<8x1xf32, #tpu.memory_space<vmem>>, %arg7: memref<8x32xf32, #tpu.memory_space<vmem>>) attributes {dimension_semantics = [#tpu.dimension_semantics<parallel>], iteration_bounds = array<i64: 1>, scalar_prefetch = 0 : i64, scratch_operands = 0 : i64, tpu.core_type = #tpu.core_type<tc>, window_params = [{transform_indices = @transform_0, window_bounds = array<i64: 8, 8, 32>}, {pipeline_mode = #tpu.pipeline_mode<synchronous>, transform_indices = @transform_1, window_bounds = array<i64: 32, 128>}, {pipeline_mode = #tpu.pipeline_mode<synchronous>, transform_indices = @transform_2, window_bounds = array<i64: 1, 128>}, {pipeline_mode = #tpu.pipeline_mode<synchronous>, transform_indices = @transform_3, window_bounds = array<i64: 32, 33>}, {pipeline_mode = #tpu.pipeline_mode<synchronous>, transform_indices = @transform_4, window_bounds = array<i64: 1, 33>}, {transform_indices = @transform_5, window_bounds = array<i64: 8, 1>}, {transform_indices = @transform_6, window_bounds = array<i64: 8, 32>}]} {
    %c0 = arith.constant 0 : index
    %c0_0 = arith.constant 0 : index
    %c0_1 = arith.constant 0 : index
    %0 = vector.load %arg1[%c0, %c0_0, %c0_1] : memref<8x8x32xf32, #tpu.memory_space<vmem>>, vector<8x8x32xf32>
    %1 = vector.shape_cast %0 : vector<8x8x32xf32> to vector<64x32xf32>
    %c0_2 = arith.constant 0 : index
    %c0_3 = arith.constant 0 : index
    %2 = vector.load %arg2[%c0_2, %c0_3] : memref<32x128xf32, #tpu.memory_space<vmem>>, vector<32x128xf32>
    %cst = arith.constant dense<0.000000e+00> : vector<64x128xf32>
    %3 = tpu.matmul %1, %2, %cst {dimension_numbers = #tpu.dot_dimension_numbers<[1], [0], [0], [1], [0, 0, 1, 1], [], []>} : vector<64x32xf32>, vector<32x128xf32>, vector<64x128xf32> -> vector<64x128xf32>
    %c0_4 = arith.constant 0 : index
    %c0_5 = arith.constant 0 : index
    %4 = vector.load %arg3[%c0_4, %c0_5] : memref<1x128xf32, #tpu.memory_space<vmem>>, vector<1x128xf32>
    %5 = vector.broadcast %4 : vector<1x128xf32> to vector<64x128xf32>
    %6 = arith.addf %3, %5 : vector<64x128xf32>
    %7 = vector.shape_cast %6 : vector<64x128xf32> to vector<8x8x128xf32>
    %8 = vector.extract_strided_slice %7 {offsets = [0, 0, 0], sizes = [8, 8, 64], strides = [1, 1, 1]} : vector<8x8x128xf32> to vector<8x8x64xf32>
    %9 = vector.extract_strided_slice %7 {offsets = [0, 0, 64], sizes = [8, 8, 64], strides = [1, 1, 1]} : vector<8x8x128xf32> to vector<8x8x64xf32>
    %10 = arith.negf %9 : vector<8x8x64xf32>
    %11 = math.exp %10 : vector<8x8x64xf32>
    %cst_6 = arith.constant 1.000000e+00 : f32
    %12 = vector.broadcast %cst_6 : f32 to vector<8x8x64xf32>
    %13 = arith.addf %12, %11 : vector<8x8x64xf32>
    %14 = arith.divf %12, %13 : vector<8x8x64xf32>
    %cst_7 = arith.constant 0.000000e+00 : f32
    %15 = vector.broadcast %cst_7 : f32 to vector<8x32xf32>
    %16 = vector.extract_strided_slice %8 {offsets = [0, 0, 0], sizes = [8, 1, 32], strides = [1, 1, 1]} : vector<8x8x64xf32> to vector<8x1x32xf32>
    %17 = vector.shape_cast %16 : vector<8x1x32xf32> to vector<8x32xf32>
    %18 = vector.extract_strided_slice %14 {offsets = [0, 0, 0], sizes = [8, 1, 32], strides = [1, 1, 1]} : vector<8x8x64xf32> to vector<8x1x32xf32>
    %19 = vector.shape_cast %18 : vector<8x1x32xf32> to vector<8x32xf32>
    %cst_8 = arith.constant 1.000000e+00 : f32
    %20 = vector.broadcast %cst_8 : f32 to vector<8x32xf32>
    %21 = arith.subf %20, %19 : vector<8x32xf32>
    %22 = arith.mulf %21, %15 : vector<8x32xf32>
    %23 = arith.mulf %19, %17 : vector<8x32xf32>
    %24 = arith.addf %22, %23 : vector<8x32xf32>
    %25 = vector.extract_strided_slice %8 {offsets = [0, 1, 0], sizes = [8, 1, 32], strides = [1, 1, 1]} : vector<8x8x64xf32> to vector<8x1x32xf32>
    %26 = vector.shape_cast %25 : vector<8x1x32xf32> to vector<8x32xf32>
    %27 = vector.extract_strided_slice %14 {offsets = [0, 1, 0], sizes = [8, 1, 32], strides = [1, 1, 1]} : vector<8x8x64xf32> to vector<8x1x32xf32>
    %28 = vector.shape_cast %27 : vector<8x1x32xf32> to vector<8x32xf32>
    %cst_9 = arith.constant 1.000000e+00 : f32
    %29 = vector.broadcast %cst_9 : f32 to vector<8x32xf32>
    %30 = arith.subf %29, %28 : vector<8x32xf32>
    %31 = arith.mulf %30, %24 : vector<8x32xf32>
    %32 = arith.mulf %28, %26 : vector<8x32xf32>
    %33 = arith.addf %31, %32 : vector<8x32xf32>
    %34 = vector.extract_strided_slice %8 {offsets = [0, 2, 0], sizes = [8, 1, 32], strides = [1, 1, 1]} : vector<8x8x64xf32> to vector<8x1x32xf32>
    %35 = vector.shape_cast %34 : vector<8x1x32xf32> to vector<8x32xf32>
    %36 = vector.extract_strided_slice %14 {offsets = [0, 2, 0], sizes = [8, 1, 32], strides = [1, 1, 1]} : vector<8x8x64xf32> to vector<8x1x32xf32>
    %37 = vector.shape_cast %36 : vector<8x1x32xf32> to vector<8x32xf32>
    %cst_10 = arith.constant 1.000000e+00 : f32
    %38 = vector.broadcast %cst_10 : f32 to vector<8x32xf32>
    %39 = arith.subf %38, %37 : vector<8x32xf32>
    %40 = arith.mulf %39, %33 : vector<8x32xf32>
    %41 = arith.mulf %37, %35 : vector<8x32xf32>
    %42 = arith.addf %40, %41 : vector<8x32xf32>
    %43 = vector.extract_strided_slice %8 {offsets = [0, 3, 0], sizes = [8, 1, 32], strides = [1, 1, 1]} : vector<8x8x64xf32> to vector<8x1x32xf32>
    %44 = vector.shape_cast %43 : vector<8x1x32xf32> to vector<8x32xf32>
    %45 = vector.extract_strided_slice %14 {offsets = [0, 3, 0], sizes = [8, 1, 32], strides = [1, 1, 1]} : vector<8x8x64xf32> to vector<8x1x32xf32>
    %46 = vector.shape_cast %45 : vector<8x1x32xf32> to vector<8x32xf32>
    %cst_11 = arith.constant 1.000000e+00 : f32
    %47 = vector.broadcast %cst_11 : f32 to vector<8x32xf32>
    %48 = arith.subf %47, %46 : vector<8x32xf32>
    %49 = arith.mulf %48, %42 : vector<8x32xf32>
    %50 = arith.mulf %46, %44 : vector<8x32xf32>
    %51 = arith.addf %49, %50 : vector<8x32xf32>
    %52 = vector.extract_strided_slice %8 {offsets = [0, 4, 0], sizes = [8, 1, 32], strides = [1, 1, 1]} : vector<8x8x64xf32> to vector<8x1x32xf32>
    %53 = vector.shape_cast %52 : vector<8x1x32xf32> to vector<8x32xf32>
    %54 = vector.extract_strided_slice %14 {offsets = [0, 4, 0], sizes = [8, 1, 32], strides = [1, 1, 1]} : vector<8x8x64xf32> to vector<8x1x32xf32>
    %55 = vector.shape_cast %54 : vector<8x1x32xf32> to vector<8x32xf32>
    %cst_12 = arith.constant 1.000000e+00 : f32
    %56 = vector.broadcast %cst_12 : f32 to vector<8x32xf32>
    %57 = arith.subf %56, %55 : vector<8x32xf32>
    %58 = arith.mulf %57, %51 : vector<8x32xf32>
    %59 = arith.mulf %55, %53 : vector<8x32xf32>
    %60 = arith.addf %58, %59 : vector<8x32xf32>
    %61 = vector.extract_strided_slice %8 {offsets = [0, 5, 0], sizes = [8, 1, 32], strides = [1, 1, 1]} : vector<8x8x64xf32> to vector<8x1x32xf32>
    %62 = vector.shape_cast %61 : vector<8x1x32xf32> to vector<8x32xf32>
    %63 = vector.extract_strided_slice %14 {offsets = [0, 5, 0], sizes = [8, 1, 32], strides = [1, 1, 1]} : vector<8x8x64xf32> to vector<8x1x32xf32>
    %64 = vector.shape_cast %63 : vector<8x1x32xf32> to vector<8x32xf32>
    %cst_13 = arith.constant 1.000000e+00 : f32
    %65 = vector.broadcast %cst_13 : f32 to vector<8x32xf32>
    %66 = arith.subf %65, %64 : vector<8x32xf32>
    %67 = arith.mulf %66, %60 : vector<8x32xf32>
    %68 = arith.mulf %64, %62 : vector<8x32xf32>
    %69 = arith.addf %67, %68 : vector<8x32xf32>
    %70 = vector.extract_strided_slice %8 {offsets = [0, 6, 0], sizes = [8, 1, 32], strides = [1, 1, 1]} : vector<8x8x64xf32> to vector<8x1x32xf32>
    %71 = vector.shape_cast %70 : vector<8x1x32xf32> to vector<8x32xf32>
    %72 = vector.extract_strided_slice %14 {offsets = [0, 6, 0], sizes = [8, 1, 32], strides = [1, 1, 1]} : vector<8x8x64xf32> to vector<8x1x32xf32>
    %73 = vector.shape_cast %72 : vector<8x1x32xf32> to vector<8x32xf32>
    %cst_14 = arith.constant 1.000000e+00 : f32
    %74 = vector.broadcast %cst_14 : f32 to vector<8x32xf32>
    %75 = arith.subf %74, %73 : vector<8x32xf32>
    %76 = arith.mulf %75, %69 : vector<8x32xf32>
    %77 = arith.mulf %73, %71 : vector<8x32xf32>
    %78 = arith.addf %76, %77 : vector<8x32xf32>
    %79 = vector.extract_strided_slice %8 {offsets = [0, 7, 0], sizes = [8, 1, 32], strides = [1, 1, 1]} : vector<8x8x64xf32> to vector<8x1x32xf32>
    %80 = vector.shape_cast %79 : vector<8x1x32xf32> to vector<8x32xf32>
    %81 = vector.extract_strided_slice %14 {offsets = [0, 7, 0], sizes = [8, 1, 32], strides = [1, 1, 1]} : vector<8x8x64xf32> to vector<8x1x32xf32>
    %82 = vector.shape_cast %81 : vector<8x1x32xf32> to vector<8x32xf32>
    %cst_15 = arith.constant 1.000000e+00 : f32
    %83 = vector.broadcast %cst_15 : f32 to vector<8x32xf32>
    %84 = arith.subf %83, %82 : vector<8x32xf32>
    %85 = arith.mulf %84, %78 : vector<8x32xf32>
    %86 = arith.mulf %82, %80 : vector<8x32xf32>
    %87 = arith.addf %85, %86 : vector<8x32xf32>
    %88 = vector.extract_strided_slice %8 {offsets = [0, 0, 32], sizes = [8, 1, 32], strides = [1, 1, 1]} : vector<8x8x64xf32> to vector<8x1x32xf32>
    %89 = vector.shape_cast %88 : vector<8x1x32xf32> to vector<8x32xf32>
    %90 = vector.extract_strided_slice %14 {offsets = [0, 0, 32], sizes = [8, 1, 32], strides = [1, 1, 1]} : vector<8x8x64xf32> to vector<8x1x32xf32>
    %91 = vector.shape_cast %90 : vector<8x1x32xf32> to vector<8x32xf32>
    %cst_16 = arith.constant 1.000000e+00 : f32
    %92 = vector.broadcast %cst_16 : f32 to vector<8x32xf32>
    %93 = arith.subf %92, %91 : vector<8x32xf32>
    %94 = arith.mulf %93, %87 : vector<8x32xf32>
    %95 = arith.mulf %91, %89 : vector<8x32xf32>
    %96 = arith.addf %94, %95 : vector<8x32xf32>
    %97 = vector.extract_strided_slice %8 {offsets = [0, 1, 32], sizes = [8, 1, 32], strides = [1, 1, 1]} : vector<8x8x64xf32> to vector<8x1x32xf32>
    %98 = vector.shape_cast %97 : vector<8x1x32xf32> to vector<8x32xf32>
    %99 = vector.extract_strided_slice %14 {offsets = [0, 1, 32], sizes = [8, 1, 32], strides = [1, 1, 1]} : vector<8x8x64xf32> to vector<8x1x32xf32>
    %100 = vector.shape_cast %99 : vector<8x1x32xf32> to vector<8x32xf32>
    %cst_17 = arith.constant 1.000000e+00 : f32
    %101 = vector.broadcast %cst_17 : f32 to vector<8x32xf32>
    %102 = arith.subf %101, %100 : vector<8x32xf32>
    %103 = arith.mulf %102, %96 : vector<8x32xf32>
    %104 = arith.mulf %100, %98 : vector<8x32xf32>
    %105 = arith.addf %103, %104 : vector<8x32xf32>
    %106 = vector.extract_strided_slice %8 {offsets = [0, 2, 32], sizes = [8, 1, 32], strides = [1, 1, 1]} : vector<8x8x64xf32> to vector<8x1x32xf32>
    %107 = vector.shape_cast %106 : vector<8x1x32xf32> to vector<8x32xf32>
    %108 = vector.extract_strided_slice %14 {offsets = [0, 2, 32], sizes = [8, 1, 32], strides = [1, 1, 1]} : vector<8x8x64xf32> to vector<8x1x32xf32>
    %109 = vector.shape_cast %108 : vector<8x1x32xf32> to vector<8x32xf32>
    %cst_18 = arith.constant 1.000000e+00 : f32
    %110 = vector.broadcast %cst_18 : f32 to vector<8x32xf32>
    %111 = arith.subf %110, %109 : vector<8x32xf32>
    %112 = arith.mulf %111, %105 : vector<8x32xf32>
    %113 = arith.mulf %109, %107 : vector<8x32xf32>
    %114 = arith.addf %112, %113 : vector<8x32xf32>
    %115 = vector.extract_strided_slice %8 {offsets = [0, 3, 32], sizes = [8, 1, 32], strides = [1, 1, 1]} : vector<8x8x64xf32> to vector<8x1x32xf32>
    %116 = vector.shape_cast %115 : vector<8x1x32xf32> to vector<8x32xf32>
    %117 = vector.extract_strided_slice %14 {offsets = [0, 3, 32], sizes = [8, 1, 32], strides = [1, 1, 1]} : vector<8x8x64xf32> to vector<8x1x32xf32>
    %118 = vector.shape_cast %117 : vector<8x1x32xf32> to vector<8x32xf32>
    %cst_19 = arith.constant 1.000000e+00 : f32
    %119 = vector.broadcast %cst_19 : f32 to vector<8x32xf32>
    %120 = arith.subf %119, %118 : vector<8x32xf32>
    %121 = arith.mulf %120, %114 : vector<8x32xf32>
    %122 = arith.mulf %118, %116 : vector<8x32xf32>
    %123 = arith.addf %121, %122 : vector<8x32xf32>
    %124 = vector.extract_strided_slice %8 {offsets = [0, 4, 32], sizes = [8, 1, 32], strides = [1, 1, 1]} : vector<8x8x64xf32> to vector<8x1x32xf32>
    %125 = vector.shape_cast %124 : vector<8x1x32xf32> to vector<8x32xf32>
    %126 = vector.extract_strided_slice %14 {offsets = [0, 4, 32], sizes = [8, 1, 32], strides = [1, 1, 1]} : vector<8x8x64xf32> to vector<8x1x32xf32>
    %127 = vector.shape_cast %126 : vector<8x1x32xf32> to vector<8x32xf32>
    %cst_20 = arith.constant 1.000000e+00 : f32
    %128 = vector.broadcast %cst_20 : f32 to vector<8x32xf32>
    %129 = arith.subf %128, %127 : vector<8x32xf32>
    %130 = arith.mulf %129, %123 : vector<8x32xf32>
    %131 = arith.mulf %127, %125 : vector<8x32xf32>
    %132 = arith.addf %130, %131 : vector<8x32xf32>
    %133 = vector.extract_strided_slice %8 {offsets = [0, 5, 32], sizes = [8, 1, 32], strides = [1, 1, 1]} : vector<8x8x64xf32> to vector<8x1x32xf32>
    %134 = vector.shape_cast %133 : vector<8x1x32xf32> to vector<8x32xf32>
    %135 = vector.extract_strided_slice %14 {offsets = [0, 5, 32], sizes = [8, 1, 32], strides = [1, 1, 1]} : vector<8x8x64xf32> to vector<8x1x32xf32>
    %136 = vector.shape_cast %135 : vector<8x1x32xf32> to vector<8x32xf32>
    %cst_21 = arith.constant 1.000000e+00 : f32
    %137 = vector.broadcast %cst_21 : f32 to vector<8x32xf32>
    %138 = arith.subf %137, %136 : vector<8x32xf32>
    %139 = arith.mulf %138, %132 : vector<8x32xf32>
    %140 = arith.mulf %136, %134 : vector<8x32xf32>
    %141 = arith.addf %139, %140 : vector<8x32xf32>
    %142 = vector.extract_strided_slice %8 {offsets = [0, 6, 32], sizes = [8, 1, 32], strides = [1, 1, 1]} : vector<8x8x64xf32> to vector<8x1x32xf32>
    %143 = vector.shape_cast %142 : vector<8x1x32xf32> to vector<8x32xf32>
    %144 = vector.extract_strided_slice %14 {offsets = [0, 6, 32], sizes = [8, 1, 32], strides = [1, 1, 1]} : vector<8x8x64xf32> to vector<8x1x32xf32>
    %145 = vector.shape_cast %144 : vector<8x1x32xf32> to vector<8x32xf32>
    %cst_22 = arith.constant 1.000000e+00 : f32
    %146 = vector.broadcast %cst_22 : f32 to vector<8x32xf32>
    %147 = arith.subf %146, %145 : vector<8x32xf32>
    %148 = arith.mulf %147, %141 : vector<8x32xf32>
    %149 = arith.mulf %145, %143 : vector<8x32xf32>
    %150 = arith.addf %148, %149 : vector<8x32xf32>
    %151 = vector.extract_strided_slice %8 {offsets = [0, 7, 32], sizes = [8, 1, 32], strides = [1, 1, 1]} : vector<8x8x64xf32> to vector<8x1x32xf32>
    %152 = vector.shape_cast %151 : vector<8x1x32xf32> to vector<8x32xf32>
    %153 = vector.extract_strided_slice %14 {offsets = [0, 7, 32], sizes = [8, 1, 32], strides = [1, 1, 1]} : vector<8x8x64xf32> to vector<8x1x32xf32>
    %154 = vector.shape_cast %153 : vector<8x1x32xf32> to vector<8x32xf32>
    %cst_23 = arith.constant 1.000000e+00 : f32
    %155 = vector.broadcast %cst_23 : f32 to vector<8x32xf32>
    %156 = arith.subf %155, %154 : vector<8x32xf32>
    %157 = arith.mulf %156, %150 : vector<8x32xf32>
    %158 = arith.mulf %154, %152 : vector<8x32xf32>
    %159 = arith.addf %157, %158 : vector<8x32xf32>
    %c0_24 = arith.constant 0 : index
    %c0_25 = arith.constant 0 : index
    %160 = vector.load %arg4[%c0_24, %c0_25] : memref<32x33xf32, #tpu.memory_space<vmem>>, vector<32x33xf32>
    %cst_26 = arith.constant dense<0.000000e+00> : vector<8x33xf32>
    %161 = tpu.matmul %159, %160, %cst_26 {dimension_numbers = #tpu.dot_dimension_numbers<[1], [0], [0], [1], [0, 0, 1, 1], [], []>} : vector<8x32xf32>, vector<32x33xf32>, vector<8x33xf32> -> vector<8x33xf32>
    %c0_27 = arith.constant 0 : index
    %c0_28 = arith.constant 0 : index
    %162 = vector.load %arg5[%c0_27, %c0_28] : memref<1x33xf32, #tpu.memory_space<vmem>>, vector<1x33xf32>
    %163 = vector.broadcast %162 : vector<1x33xf32> to vector<8x33xf32>
    %164 = arith.addf %161, %163 : vector<8x33xf32>
    %165 = vector.extract_strided_slice %164 {offsets = [0, 0], sizes = [8, 32], strides = [1, 1]} : vector<8x33xf32> to vector<8x32xf32>
    %c0_29 = arith.constant 0 : index
    %c0_30 = arith.constant 0 : index
    %166 = vector.load %arg7[%c0_29, %c0_30] : memref<8x32xf32, #tpu.memory_space<vmem>>, vector<8x32xf32>
    tpu.vector_store %arg7[%c0_29, %c0_30], %165 {strides = array<i32>} : memref<8x32xf32, #tpu.memory_space<vmem>>, vector<8x32xf32>,
    %167 = vector.extract_strided_slice %164 {offsets = [0, 32], sizes = [8, 1], strides = [1, 1]} : vector<8x33xf32> to vector<8x1xf32>
    %168 = arith.negf %167 : vector<8x1xf32>
    %169 = math.exp %168 : vector<8x1xf32>
    %cst_31 = arith.constant 1.000000e+00 : f32
    %170 = vector.broadcast %cst_31 : f32 to vector<8x1xf32>
    %171 = arith.addf %170, %169 : vector<8x1xf32>
    %172 = arith.divf %170, %171 : vector<8x1xf32>
    %c0_32 = arith.constant 0 : index
    %c0_33 = arith.constant 0 : index
    %173 = vector.load %arg6[%c0_32, %c0_33] : memref<8x1xf32, #tpu.memory_space<vmem>>, vector<8x1xf32>
    tpu.vector_store %arg6[%c0_32, %c0_33], %172 {strides = array<i32>} : memref<8x1xf32, #tpu.memory_space<vmem>>, vector<8x1xf32>,
    return
  }
  func.func @transform_0(%arg0: i32) -> (i32, i32, i32) {
    %c0_i32 = arith.constant 0 : i32
    %c0_i32_0 = arith.constant 0 : i32
    %c0_i32_1 = arith.constant 0 : i32
    return %arg0, %c0_i32, %c0_i32_0 : i32, i32, i32
  }
  func.func @transform_1(%arg0: i32) -> (i32, i32) {
    %c0_i32 = arith.constant 0 : i32
    %c0_i32_0 = arith.constant 0 : i32
    %c0_i32_1 = arith.constant 0 : i32
    return %c0_i32, %c0_i32_0 : i32, i32
  }
  func.func @transform_2(%arg0: i32) -> (i32, i32) {
    %c0_i32 = arith.constant 0 : i32
    %c0_i32_0 = arith.constant 0 : i32
    %c0_i32_1 = arith.constant 0 : i32
    return %c0_i32, %c0_i32_0 : i32, i32
  }
  func.func @transform_3(%arg0: i32) -> (i32, i32) {
    %c0_i32 = arith.constant 0 : i32
    %c0_i32_0 = arith.constant 0 : i32
    %c0_i32_1 = arith.constant 0 : i32
    return %c0_i32, %c0_i32_0 : i32, i32
  }
  func.func @transform_4(%arg0: i32) -> (i32, i32) {
    %c0_i32 = arith.constant 0 : i32
    %c0_i32_0 = arith.constant 0 : i32
    %c0_i32_1 = arith.constant 0 : i32
    return %c0_i32, %c0_i32_0 : i32, i32
  }
  func.func @transform_5(%arg0: i32) -> (i32, i32) {
    %c0_i32 = arith.constant 0 : i32
    %c0_i32_0 = arith.constant 0 : i32
    return %arg0, %c0_i32 : i32, i32
  }
  func.func @transform_6(%arg0: i32) -> (i32, i32) {
    %c0_i32 = arith.constant 0 : i32
    %c0_i32_0 = arith.constant 0 : i32
    return %arg0, %c0_i32 : i32, i32
  }
}

</mosaic_0001>

<llo_original>
// kernel: gru_model_forward.1
$region0: #{gru_model_forward.1}
  #allocation0 [shape = 'u32[]', space=smem, size = 0x4, offset = 0x4, fixed_abs, tag = 'smem constant byte address 0x4 - core index']
  #allocation1 [shape = 'u32[144,128]{1,0:T(1,128)}', space=vmem, size = 0x12000, scoped, tag = 'internal scratch']
  %s0 = inlined_call_operand.vmem [shape: f32[8,8,32], index: 0, kind: input, shape index: {}]
  %s1 = inlined_call_operand.vmem [shape: f32[32,128], index: 1, kind: input, shape index: {}]
  %s2 = inlined_call_operand.vmem [shape: f32[1,128], index: 2, kind: input, shape index: {}]
  %s3 = inlined_call_operand.vmem [shape: f32[32,33], index: 3, kind: input, shape index: {}]
  %s4 = inlined_call_operand.vmem [shape: f32[1,33], index: 4, kind: input, shape index: {}]
  %s5 = inlined_call_operand.vmem [shape: f32[8,1], index: 5, kind: output, shape index: {0}]
  %s6 = inlined_call_operand.hbm [shape: f32[8,32], index: 6, kind: output, shape index: {1}]
  %7 = xla_tuple %s5, %s6
  %s8 = sld [smem:[#allocation0]]
  $region38: #{gru_model_forward.1} parent=0
    _
  %s10 = ssub.s32 1, %s8
  %s11 = scalar_select 0, %s10, %s8
  $region1: #{gru_model_forward.1} parent=0
    #allocation2 [shape = 'u8[4096]{0}', space=vmem, size = 0x1000, scoped, tag = 'output window, operand 1, single buffered']
    #allocation3 [shape = 's32[1]{0}', space=sflag, size = 0x4, scoped, tag = 'scoped memory for gru_model_forward.1']
    %12 = vsyncpa [#allocation3], 0
    // Predicated region
    $region2: #{gru_model_forward.1} parent=1 // pred_check
      _
    $region3: #{gru_model_forward.1} parent=1 // pred_check_branch
      %14 = sbr.rel (0) target = $region5
    $region4: #{gru_model_forward.1} parent=1 // pred_region
      _
    $region5: #{gru_model_forward.1} parent=1 // pred_fallthru
      _
    // Predicated region
    $region6: #{gru_model_forward.1} parent=1 // pred_check
      _
    $region7: #{gru_model_forward.1} parent=1 // pred_check_branch
      %16 = sbr.rel (0) target = $region9
    $region8: #{gru_model_forward.1} parent=1 // pred_region
      _
    $region9: #{gru_model_forward.1} parent=1 // pred_fallthru
      _
    // Predicated region
    $region10: #{gru_model_forward.1} parent=1 // pred_check
      _
    $region11: #{gru_model_forward.1} parent=1 // pred_check_branch
      %18 = sbr.rel (0) target = $region13
    $region12: #{gru_model_forward.1} parent=1 // pred_region
      _
    $region13: #{gru_model_forward.1} parent=1 // pred_fallthru
      _
    // Predicated region
    $region14: #{gru_model_forward.1} parent=1 // pred_check
      _
    $region15: #{gru_model_forward.1} parent=1 // pred_check_branch
      %20 = sbr.rel (0) target = $region17
    $region16: #{gru_model_forward.1} parent=1 // pred_region
      _
    $region17: #{gru_model_forward.1} parent=1 // pred_fallthru
      _
    // Predicated region
    $region18: #{gru_model_forward.1} parent=1 // pred_check
      _
    $region19: #{gru_model_forward.1} parent=1 // pred_check_branch
      %22 = sbr.rel (0) target = $region21
    $region20: #{gru_model_forward.1} parent=1 // pred_region
      _
    $region21: #{gru_model_forward.1} parent=1 // pred_fallthru
      _
    %v23 = vld [vmem:[%s0] sm:$0xff]
    %v24 = vld [vmem:[%s0 + $0x8] sm:$0xff]
    %v25 = vld [vmem:[%s0 + $0x10] sm:$0xff]
    %v26 = vld [vmem:[%s0 + $0x18] sm:$0xff]
    %v27 = vld [vmem:[%s0 + $0x20] sm:$0xff]
    %v28 = vld [vmem:[%s0 + $0x28] sm:$0xff]
    %v29 = vld [vmem:[%s0 + $0x30] sm:$0xff]
    %v30 = vld [vmem:[%s0 + $0x38] sm:$0xff]
    %v31 = vld [vmem:[%s1] sm:$0xff]
    %v32 = vld [vmem:[%s1 + $0x8] sm:$0xff]
    %v33 = vld [vmem:[%s1 + $0x10] sm:$0xff]
    %v34 = vld [vmem:[%s1 + $0x18] sm:$0xff]
    %v35 = vld [vmem:[%s2] sm:$0x1]
    %v37 = vlaneseq
    %v38 = vshrl.u32 %v37, 7
    %v39 = vsub.s32 0, %v38
    %v40 = vrot.slane %v35, %v39
    %vm42 = vcmask 261120
    %v44 = vsel %vm42, %v23, 0
    %v47 = vsel %vm42, %v24, 0
    %v50 = vsel %vm42, %v25, 0
    %v53 = vsel %vm42, %v26, 0
    %v56 = vsel %vm42, %v27, 0
    %v59 = vsel %vm42, %v28, 0
    %v62 = vsel %vm42, %v29, 0
    %v65 = vsel %vm42, %v30, 0
    %67 = vmatprep.subr.mxu0 0.0
    %68 = vmatpush1.msra.mxu0 0.0
    %69 = vmatprep.subr.mxu0 0.0
    %70 = vmatpush1.msra.mxu0 0.0
    %71 = vmatprep.subr.mxu0 0.0
    %72 = vmatpush1.msra.mxu0 0.0
    %73 = vmatprep.subr.mxu0 0.0
    %74 = vmatpush1.msra.mxu0 0.0
    %75 = vmatprep.subr.mxu0 0.0
    %76 = vmatpush1.msra.mxu0 0.0
    %77 = vmatprep.subr.mxu0 0.0
    %78 = vmatpush1.msra.mxu0 0.0
    %79 = vmatprep.subr.mxu0 0.0
    %80 = vmatpush1.msra.mxu0 0.0
    %81 = vmatprep.subr.mxu0 0.0
    %82 = vmatpush1.msra.mxu0 0.0
    %83 = vmatprep.subr.mxu0 0.0
    %84 = vmatpush1.msra.mxu0 0.0
    %85 = vmatprep.subr.mxu0 0.0
    %86 = vmatpush1.msra.mxu0 0.0
    %87 = vmatprep.subr.mxu0 0.0
    %88 = vmatpush1.msra.mxu0 0.0
    %89 = vmatprep.subr.mxu0 0.0
    %90 = vmatpush1.msra.mxu0 0.0
    %91 = vmatprep.subr.mxu0 0.0
    %92 = vmatpush1.msra.mxu0 %v34
    %93 = vmatprep.subr.mxu0 0.0
    %94 = vmatpush1.msra.mxu0 %v33
    %95 = vmatprep.subr.mxu0 0.0
    %96 = vmatpush1.msra.mxu0 %v32
    %97 = vmatprep.subr.mxu0 0.0
    %98 = vmatpush1.msra.mxu0 %v31
    %99 = vmatprep.subr.mxu0 0.0
    %100 = vmatpush2.msra.mxu0 0.0
    %101 = vmatprep.subr.mxu0 0.0
    %102 = vmatpush2.msra.mxu0 0.0
    %103 = vmatprep.subr.mxu0 0.0
    %104 = vmatpush2.msra.mxu0 0.0
    %105 = vmatprep.subr.mxu0 0.0
    %106 = vmatpush2.msra.mxu0 0.0
    %107 = vmatprep.subr.mxu0 0.0
    %108 = vmatpush2.msra.mxu0 0.0
    %109 = vmatprep.subr.mxu0 0.0
    %110 = vmatpush2.msra.mxu0 0.0
    %111 = vmatprep.subr.mxu0 0.0
    %112 = vmatpush2.msra.mxu0 0.0
    %113 = vmatprep.subr.mxu0 0.0
    %114 = vmatpush2.msra.mxu0 0.0
    %115 = vmatprep.subr.mxu0 0.0
    %116 = vmatpush2.msra.mxu0 0.0
    %117 = vmatprep.subr.mxu0 0.0
    %118 = vmatpush2.msra.mxu0 0.0
    %119 = vmatprep.subr.mxu0 0.0
    %120 = vmatpush2.msra.mxu0 0.0
    %121 = vmatprep.subr.mxu0 0.0
    %122 = vmatpush2.msra.mxu0 0.0
    %123 = vmatprep.subr.mxu0 0.0
    %124 = vmatpush2.msra.mxu0 0.0
    %125 = vmatprep.subr.mxu0 0.0
    %126 = vmatpush2.msra.mxu0 0.0
    %127 = vmatprep.subr.mxu0 0.0
    %128 = vmatpush2.msra.mxu0 0.0
    %129 = vmatprep.subr.mxu0 0.0
    %130 = vmatpush2.msra.mxu0 0.0
    %131 = vmatprep.mubr.f32.mxu0 0.0
    %132 = vmatmul.mubr.f32.gmra.mxu0 %v44
    %v133 = vpop.f32.mrf.mxu0
    %v134 = vadd.f32 %v40, %v133
    %v135 = vpop.f32.mrf.mxu0
    %136 = vmatprep.mubr.f32.mxu0 0.0
    %137 = vmatmul.mubr.f32.gmra.mxu0 %v47
    %v138 = vpop.f32.mrf.mxu0
    %v139 = vadd.f32 %v40, %v138
    %v140 = vpop.f32.mrf.mxu0
    %141 = vmatprep.mubr.f32.mxu0 0.0
    %142 = vmatmul.mubr.f32.gmra.mxu0 %v50
    %v143 = vpop.f32.mrf.mxu0
    %v144 = vadd.f32 %v40, %v143
    %v145 = vpop.f32.mrf.mxu0
    %146 = vmatprep.mubr.f32.mxu0 0.0
    %147 = vmatmul.mubr.f32.gmra.mxu0 %v53
    %v148 = vpop.f32.mrf.mxu0
    %v149 = vadd.f32 %v40, %v148
    %v150 = vpop.f32.mrf.mxu0
    %151 = vmatprep.mubr.f32.mxu0 0.0
    %152 = vmatmul.mubr.f32.gmra.mxu0 %v56
    %v153 = vpop.f32.mrf.mxu0
    %v154 = vadd.f32 %v40, %v153
    %v155 = vpop.f32.mrf.mxu0
    %156 = vmatprep.mubr.f32.mxu0 0.0
    %157 = vmatmul.mubr.f32.gmra.mxu0 %v59
    %v158 = vpop.f32.mrf.mxu0
    %v159 = vadd.f32 %v40, %v158
    %v160 = vpop.f32.mrf.mxu0
    %161 = vmatprep.mubr.f32.mxu0 0.0
    %162 = vmatmul.mubr.f32.gmra.mxu0 %v62
    %v163 = vpop.f32.mrf.mxu0
    %v164 = vadd.f32 %v40, %v163
    %v165 = vpop.f32.mrf.mxu0
    %166 = vmatprep.mubr.f32.mxu0 0.0
    %167 = vmatmul.mubr.f32.gmra.mxu0 %v65
    %v168 = vpop.f32.mrf.mxu0
    %v169 = vadd.f32 %v40, %v168
    %v170 = vpop.f32.mrf.mxu0
    %171 = vdwg.mxu0
    %v172 = vxor.u32 %v134, 2147483648
    %v173 = vxor.u32 %v139, 2147483648
    %v174 = vxor.u32 %v144, 2147483648
    %v175 = vxor.u32 %v149, 2147483648
    %v176 = vxor.u32 %v154, 2147483648
    %v177 = vxor.u32 %v159, 2147483648
    %v178 = vxor.u32 %v164, 2147483648
    %v179 = vxor.u32 %v169, 2147483648
    %v180 = vmul.f32 %v172, 1.442695
    %v181 = vpow.pop %v180
    %v182 = vmul.f32 %v173, 1.442695
    %v183 = vpow.pop %v182
    %v184 = vmul.f32 %v174, 1.442695
    %v185 = vpow.pop %v184
    %v186 = vmul.f32 %v175, 1.442695
    %v187 = vpow.pop %v186
    %v188 = vmul.f32 %v176, 1.442695
    %v189 = vpow.pop %v188
    %v190 = vmul.f32 %v177, 1.442695
    %v191 = vpow.pop %v190
    %v192 = vmul.f32 %v178, 1.442695
    %v193 = vpow.pop %v192
    %v194 = vmul.f32 %v179, 1.442695
    %v195 = vpow.pop %v194
    %v196 = vadd.f32 %v181, 1.0
    %v197 = vadd.f32 %v183, 1.0
    %v198 = vadd.f32 %v185, 1.0
    %v199 = vadd.f32 %v187, 1.0
    %v200 = vadd.f32 %v189, 1.0
    %v201 = vadd.f32 %v191, 1.0
    %v202 = vadd.f32 %v193, 1.0
    %v203 = vadd.f32 %v195, 1.0
    %v204 = vrcp.pop %v196
    %v205 = vmul.f32 1.0, %v204
    %v206 = vrcp.pop %v197
    %v207 = vmul.f32 1.0, %v206
    %v208 = vrcp.pop %v198
    %v209 = vmul.f32 1.0, %v208
    %v210 = vrcp.pop %v199
    %v211 = vmul.f32 1.0, %v210
    %v212 = vrcp.pop %v200
    %v213 = vmul.f32 1.0, %v212
    %v214 = vrcp.pop %v201
    %v215 = vmul.f32 1.0, %v214
    %v216 = vrcp.pop %v202
    %v217 = vmul.f32 1.0, %v216
    %v218 = vrcp.pop %v203
    %v219 = vmul.f32 1.0, %v218
    %v220 = vsub.f32 1.0, %v205
    %v221 = vsub.f32 1.0, %v207
    %v222 = vsub.f32 1.0, %v209
    %v223 = vsub.f32 1.0, %v211
    %v224 = vsub.f32 1.0, %v213
    %v225 = vsub.f32 1.0, %v215
    %v226 = vsub.f32 1.0, %v217
    %v227 = vsub.f32 1.0, %v219
    %v228 = vmul.f32 %v220, 0.0
    %v229 = vmul.f32 %v221, 0.0
    %v230 = vmul.f32 %v222, 0.0
    %v231 = vmul.f32 %v223, 0.0
    %v232 = vmul.f32 %v224, 0.0
    %v233 = vmul.f32 %v225, 0.0
    %v234 = vmul.f32 %v226, 0.0
    %v235 = vmul.f32 %v227, 0.0
    %244 = vrot.lane.b32.xlu0 %v134, 64
    %v245 = vpop.permute.xlu0 %244
    %246 = vrot.lane.b32.xlu0 %v139, 64
    %v247 = vpop.permute.xlu0 %246
    %248 = vrot.lane.b32.xlu0 %v144, 64
    %v249 = vpop.permute.xlu0 %248
    %250 = vrot.lane.b32.xlu0 %v149, 64
    %v251 = vpop.permute.xlu0 %250
    %252 = vrot.lane.b32.xlu0 %v154, 64
    %v253 = vpop.permute.xlu0 %252
    %254 = vrot.lane.b32.xlu0 %v159, 64
    %v255 = vpop.permute.xlu0 %254
    %256 = vrot.lane.b32.xlu0 %v164, 64
    %v257 = vpop.permute.xlu0 %256
    %258 = vrot.lane.b32.xlu0 %v169, 64
    %v259 = vpop.permute.xlu0 %258
    %v268 = vmul.f32 %v205, %v245
    %v269 = vmul.f32 %v207, %v247
    %v270 = vmul.f32 %v209, %v249
    %v271 = vmul.f32 %v211, %v251
    %v272 = vmul.f32 %v213, %v253
    %v273 = vmul.f32 %v215, %v255
    %v274 = vmul.f32 %v217, %v257
    %v275 = vmul.f32 %v219, %v259
    %v276 = vadd.f32 %v228, %v268
    %v277 = vadd.f32 %v229, %v269
    %v278 = vadd.f32 %v230, %v270
    %v279 = vadd.f32 %v231, %v271
    %v280 = vadd.f32 %v232, %v272
    %v281 = vadd.f32 %v233, %v273
    %v282 = vadd.f32 %v234, %v274
    %v283 = vadd.f32 %v235, %v275
    %v292 = vrot.slane %v276, 7
    %v293 = vrot.slane %v277, 7
    %v294 = vrot.slane %v278, 7
    %v295 = vrot.slane %v279, 7
    %v296 = vrot.slane %v280, 7
    %v297 = vrot.slane %v281, 7
    %v298 = vrot.slane %v282, 7
    %v299 = vrot.slane %v283, 7
    %v308 = vmul.f32 %v220, %v292
    %v309 = vmul.f32 %v221, %v293
    %v310 = vmul.f32 %v222, %v294
    %v311 = vmul.f32 %v223, %v295
    %v312 = vmul.f32 %v224, %v296
    %v313 = vmul.f32 %v225, %v297
    %v314 = vmul.f32 %v226, %v298
    %v315 = vmul.f32 %v227, %v299
    %v316 = vadd.f32 %v308, %v268
    %v317 = vadd.f32 %v309, %v269
    %v318 = vadd.f32 %v310, %v270
    %v319 = vadd.f32 %v311, %v271
    %v320 = vadd.f32 %v312, %v272
    %v321 = vadd.f32 %v313, %v273
    %v322 = vadd.f32 %v314, %v274
    %v323 = vadd.f32 %v315, %v275
    %v332 = vrot.slane %v316, 7
    %v333 = vrot.slane %v317, 7
    %v334 = vrot.slane %v318, 7
    %v335 = vrot.slane %v319, 7
    %v336 = vrot.slane %v320, 7
    %v337 = vrot.slane %v321, 7
    %v338 = vrot.slane %v322, 7
    %v339 = vrot.slane %v323, 7
    %v348 = vmul.f32 %v220, %v332
    %v349 = vmul.f32 %v221, %v333
    %v350 = vmul.f32 %v222, %v334
    %v351 = vmul.f32 %v223, %v335
    %v352 = vmul.f32 %v224, %v336
    %v353 = vmul.f32 %v225, %v337
    %v354 = vmul.f32 %v226, %v338
    %v355 = vmul.f32 %v227, %v339
    %v356 = vadd.f32 %v348, %v268
    %v357 = vadd.f32 %v349, %v269
    %v358 = vadd.f32 %v350, %v270
    %v359 = vadd.f32 %v351, %v271
    %v360 = vadd.f32 %v352, %v272
    %v361 = vadd.f32 %v353, %v273
    %v362 = vadd.f32 %v354, %v274
    %v363 = vadd.f32 %v355, %v275
    %v372 = vrot.slane %v356, 7
    %v373 = vrot.slane %v357, 7
    %v374 = vrot.slane %v358, 7
    %v375 = vrot.slane %v359, 7
    %v376 = vrot.slane %v360, 7
    %v377 = vrot.slane %v361, 7
    %v378 = vrot.slane %v362, 7
    %v379 = vrot.slane %v363, 7
    %v388 = vmul.f32 %v220, %v372
    %v389 = vmul.f32 %v221, %v373
    %v390 = vmul.f32 %v222, %v374
    %v391 = vmul.f32 %v223, %v375
    %v392 = vmul.f32 %v224, %v376
    %v393 = vmul.f32 %v225, %v377
    %v394 = vmul.f32 %v226, %v378
    %v395 = vmul.f32 %v227, %v379
    %v396 = vadd.f32 %v388, %v268
    %v397 = vadd.f32 %v389, %v269
    %v398 = vadd.f32 %v390, %v270
    %v399 = vadd.f32 %v391, %v271
    %v400 = vadd.f32 %v392, %v272
    %v401 = vadd.f32 %v393, %v273
    %v402 = vadd.f32 %v394, %v274
    %v403 = vadd.f32 %v395, %v275
    %v412 = vrot.slane %v396, 7
    %v413 = vrot.slane %v397, 7
    %v414 = vrot.slane %v398, 7
    %v415 = vrot.slane %v399, 7
    %v416 = vrot.slane %v400, 7
    %v417 = vrot.slane %v401, 7
    %v418 = vrot.slane %v402, 7
    %v419 = vrot.slane %v403, 7
    %v428 = vmul.f32 %v220, %v412
    %v429 = vmul.f32 %v221, %v413
    %v430 = vmul.f32 %v222, %v414
    %v431 = vmul.f32 %v223, %v415
    %v432 = vmul.f32 %v224, %v416
    %v433 = vmul.f32 %v225, %v417
    %v434 = vmul.f32 %v226, %v418
    %v435 = vmul.f32 %v227, %v419
    %v436 = vadd.f32 %v428, %v268
    %v437 = vadd.f32 %v429, %v269
    %v438 = vadd.f32 %v430, %v270
    %v439 = vadd.f32 %v431, %v271
    %v440 = vadd.f32 %v432, %v272
    %v441 = vadd.f32 %v433, %v273
    %v442 = vadd.f32 %v434, %v274
    %v443 = vadd.f32 %v435, %v275
    %v452 = vrot.slane %v436, 7
    %v453 = vrot.slane %v437, 7
    %v454 = vrot.slane %v438, 7
    %v455 = vrot.slane %v439, 7
    %v456 = vrot.slane %v440, 7
    %v457 = vrot.slane %v441, 7
    %v458 = vrot.slane %v442, 7
    %v459 = vrot.slane %v443, 7
    %v468 = vmul.f32 %v220, %v452
    %v469 = vmul.f32 %v221, %v453
    %v470 = vmul.f32 %v222, %v454
    %v471 = vmul.f32 %v223, %v455
    %v472 = vmul.f32 %v224, %v456
    %v473 = vmul.f32 %v225, %v457
    %v474 = vmul.f32 %v226, %v458
    %v475 = vmul.f32 %v227, %v459
    %v476 = vadd.f32 %v468, %v268
    %v477 = vadd.f32 %v469, %v269
    %v478 = vadd.f32 %v470, %v270
    %v479 = vadd.f32 %v471, %v271
    %v480 = vadd.f32 %v472, %v272
    %v481 = vadd.f32 %v473, %v273
    %v482 = vadd.f32 %v474, %v274
    %v483 = vadd.f32 %v475, %v275
    %v492 = vrot.slane %v476, 7
    %v493 = vrot.slane %v477, 7
    %v494 = vrot.slane %v478, 7
    %v495 = vrot.slane %v479, 7
    %v496 = vrot.slane %v480, 7
    %v497 = vrot.slane %v481, 7
    %v498 = vrot.slane %v482, 7
    %v499 = vrot.slane %v483, 7
    %v508 = vmul.f32 %v220, %v492
    %v509 = vmul.f32 %v221, %v493
    %v510 = vmul.f32 %v222, %v494
    %v511 = vmul.f32 %v223, %v495
    %v512 = vmul.f32 %v224, %v496
    %v513 = vmul.f32 %v225, %v497
    %v514 = vmul.f32 %v226, %v498
    %v515 = vmul.f32 %v227, %v499
    %v516 = vadd.f32 %v508, %v268
    %v517 = vadd.f32 %v509, %v269
    %v518 = vadd.f32 %v510, %v270
    %v519 = vadd.f32 %v511, %v271
    %v520 = vadd.f32 %v512, %v272
    %v521 = vadd.f32 %v513, %v273
    %v522 = vadd.f32 %v514, %v274
    %v523 = vadd.f32 %v515, %v275
    %v532 = vrot.slane %v516, 7
    %v533 = vrot.slane %v517, 7
    %v534 = vrot.slane %v518, 7
    %v535 = vrot.slane %v519, 7
    %v536 = vrot.slane %v520, 7
    %v537 = vrot.slane %v521, 7
    %v538 = vrot.slane %v522, 7
    %v539 = vrot.slane %v523, 7
    %v548 = vmul.f32 %v220, %v532
    %v549 = vmul.f32 %v221, %v533
    %v550 = vmul.f32 %v222, %v534
    %v551 = vmul.f32 %v223, %v535
    %v552 = vmul.f32 %v224, %v536
    %v553 = vmul.f32 %v225, %v537
    %v554 = vmul.f32 %v226, %v538
    %v555 = vmul.f32 %v227, %v539
    %v556 = vadd.f32 %v548, %v268
    %v557 = vadd.f32 %v549, %v269
    %v558 = vadd.f32 %v550, %v270
    %v559 = vadd.f32 %v551, %v271
    %v560 = vadd.f32 %v552, %v272
    %v561 = vadd.f32 %v553, %v273
    %v562 = vadd.f32 %v554, %v274
    %v563 = vadd.f32 %v555, %v275
    %v572 = vrot.slane %v556, 7
    %v573 = vrot.slane %v557, 7
    %v574 = vrot.slane %v558, 7
    %v575 = vrot.slane %v559, 7
    %v576 = vrot.slane %v560, 7
    %v577 = vrot.slane %v561, 7
    %v578 = vrot.slane %v562, 7
    %v579 = vrot.slane %v563, 7
    %580 = vrot.lane.b32.xlu0 %v572, 32
    %v581 = vpop.permute.xlu0 %580
    %582 = vrot.lane.b32.xlu0 %v573, 32
    %v583 = vpop.permute.xlu0 %582
    %584 = vrot.lane.b32.xlu0 %v574, 32
    %v585 = vpop.permute.xlu0 %584
    %586 = vrot.lane.b32.xlu0 %v575, 32
    %v587 = vpop.permute.xlu0 %586
    %588 = vrot.lane.b32.xlu0 %v576, 32
    %v589 = vpop.permute.xlu0 %588
    %590 = vrot.lane.b32.xlu0 %v577, 32
    %v591 = vpop.permute.xlu0 %590
    %592 = vrot.lane.b32.xlu0 %v578, 32
    %v593 = vpop.permute.xlu0 %592
    %594 = vrot.lane.b32.xlu0 %v579, 32
    %v595 = vpop.permute.xlu0 %594
    %v604 = vmul.f32 %v220, %v581
    %v605 = vmul.f32 %v221, %v583
    %v606 = vmul.f32 %v222, %v585
    %v607 = vmul.f32 %v223, %v587
    %v608 = vmul.f32 %v224, %v589
    %v609 = vmul.f32 %v225, %v591
    %v610 = vmul.f32 %v226, %v593
    %v611 = vmul.f32 %v227, %v595
    %v612 = vadd.f32 %v604, %v268
    %v613 = vadd.f32 %v605, %v269
    %v614 = vadd.f32 %v606, %v270
    %v615 = vadd.f32 %v607, %v271
    %v616 = vadd.f32 %v608, %v272
    %v617 = vadd.f32 %v609, %v273
    %v618 = vadd.f32 %v610, %v274
    %v619 = vadd.f32 %v611, %v275
    %v628 = vrot.slane %v612, 7
    %v629 = vrot.slane %v613, 7
    %v630 = vrot.slane %v614, 7
    %v631 = vrot.slane %v615, 7
    %v632 = vrot.slane %v616, 7
    %v633 = vrot.slane %v617, 7
    %v634 = vrot.slane %v618, 7
    %v635 = vrot.slane %v619, 7
    %v644 = vmul.f32 %v220, %v628
    %v645 = vmul.f32 %v221, %v629
    %v646 = vmul.f32 %v222, %v630
    %v647 = vmul.f32 %v223, %v631
    %v648 = vmul.f32 %v224, %v632
    %v649 = vmul.f32 %v225, %v633
    %v650 = vmul.f32 %v226, %v634
    %v651 = vmul.f32 %v227, %v635
    %v652 = vadd.f32 %v644, %v268
    %v653 = vadd.f32 %v645, %v269
    %v654 = vadd.f32 %v646, %v270
    %v655 = vadd.f32 %v647, %v271
    %v656 = vadd.f32 %v648, %v272
    %v657 = vadd.f32 %v649, %v273
    %v658 = vadd.f32 %v650, %v274
    %v659 = vadd.f32 %v651, %v275
    %v668 = vrot.slane %v652, 7
    %v669 = vrot.slane %v653, 7
    %v670 = vrot.slane %v654, 7
    %v671 = vrot.slane %v655, 7
    %v672 = vrot.slane %v656, 7
    %v673 = vrot.slane %v657, 7
    %v674 = vrot.slane %v658, 7
    %v675 = vrot.slane %v659, 7
    %v684 = vmul.f32 %v220, %v668
    %v685 = vmul.f32 %v221, %v669
    %v686 = vmul.f32 %v222, %v670
    %v687 = vmul.f32 %v223, %v671
    %v688 = vmul.f32 %v224, %v672
    %v689 = vmul.f32 %v225, %v673
    %v690 = vmul.f32 %v226, %v674
    %v691 = vmul.f32 %v227, %v675
    %v692 = vadd.f32 %v684, %v268
    %v693 = vadd.f32 %v685, %v269
    %v694 = vadd.f32 %v686, %v270
    %v695 = vadd.f32 %v687, %v271
    %v696 = vadd.f32 %v688, %v272
    %v697 = vadd.f32 %v689, %v273
    %v698 = vadd.f32 %v690, %v274
    %v699 = vadd.f32 %v691, %v275
    %v708 = vrot.slane %v692, 7
    %v709 = vrot.slane %v693, 7
    %v710 = vrot.slane %v694, 7
    %v711 = vrot.slane %v695, 7
    %v712 = vrot.slane %v696, 7
    %v713 = vrot.slane %v697, 7
    %v714 = vrot.slane %v698, 7
    %v715 = vrot.slane %v699, 7
    %v724 = vmul.f32 %v220, %v708
    %v725 = vmul.f32 %v221, %v709
    %v726 = vmul.f32 %v222, %v710
    %v727 = vmul.f32 %v223, %v711
    %v728 = vmul.f32 %v224, %v712
    %v729 = vmul.f32 %v225, %v713
    %v730 = vmul.f32 %v226, %v714
    %v731 = vmul.f32 %v227, %v715
    %v732 = vadd.f32 %v724, %v268
    %v733 = vadd.f32 %v725, %v269
    %v734 = vadd.f32 %v726, %v270
    %v735 = vadd.f32 %v727, %v271
    %v736 = vadd.f32 %v728, %v272
    %v737 = vadd.f32 %v729, %v273
    %v738 = vadd.f32 %v730, %v274
    %v739 = vadd.f32 %v731, %v275
    %v748 = vrot.slane %v732, 7
    %v749 = vrot.slane %v733, 7
    %v750 = vrot.slane %v734, 7
    %v751 = vrot.slane %v735, 7
    %v752 = vrot.slane %v736, 7
    %v753 = vrot.slane %v737, 7
    %v754 = vrot.slane %v738, 7
    %v755 = vrot.slane %v739, 7
    %v764 = vmul.f32 %v220, %v748
    %v765 = vmul.f32 %v221, %v749
    %v766 = vmul.f32 %v222, %v750
    %v767 = vmul.f32 %v223, %v751
    %v768 = vmul.f32 %v224, %v752
    %v769 = vmul.f32 %v225, %v753
    %v770 = vmul.f32 %v226, %v754
    %v771 = vmul.f32 %v227, %v755
    %v772 = vadd.f32 %v764, %v268
    %v773 = vadd.f32 %v765, %v269
    %v774 = vadd.f32 %v766, %v270
    %v775 = vadd.f32 %v767, %v271
    %v776 = vadd.f32 %v768, %v272
    %v777 = vadd.f32 %v769, %v273
    %v778 = vadd.f32 %v770, %v274
    %v779 = vadd.f32 %v771, %v275
    %v788 = vrot.slane %v772, 7
    %v789 = vrot.slane %v773, 7
    %v790 = vrot.slane %v774, 7
    %v791 = vrot.slane %v775, 7
    %v792 = vrot.slane %v776, 7
    %v793 = vrot.slane %v777, 7
    %v794 = vrot.slane %v778, 7
    %v795 = vrot.slane %v779, 7
    %v804 = vmul.f32 %v220, %v788
    %v805 = vmul.f32 %v221, %v789
    %v806 = vmul.f32 %v222, %v790
    %v807 = vmul.f32 %v223, %v791
    %v808 = vmul.f32 %v224, %v792
    %v809 = vmul.f32 %v225, %v793
    %v810 = vmul.f32 %v226, %v794
    %v811 = vmul.f32 %v227, %v795
    %v812 = vadd.f32 %v804, %v268
    %v813 = vadd.f32 %v805, %v269
    %v814 = vadd.f32 %v806, %v270
    %v815 = vadd.f32 %v807, %v271
    %v816 = vadd.f32 %v808, %v272
    %v817 = vadd.f32 %v809, %v273
    %v818 = vadd.f32 %v810, %v274
    %v819 = vadd.f32 %v811, %v275
    %v828 = vrot.slane %v812, 7
    %v829 = vrot.slane %v813, 7
    %v830 = vrot.slane %v814, 7
    %v831 = vrot.slane %v815, 7
    %v832 = vrot.slane %v816, 7
    %v833 = vrot.slane %v817, 7
    %v834 = vrot.slane %v818, 7
    %v835 = vrot.slane %v819, 7
    %v844 = vmul.f32 %v220, %v828
    %v845 = vmul.f32 %v221, %v829
    %v846 = vmul.f32 %v222, %v830
    %v847 = vmul.f32 %v223, %v831
    %v848 = vmul.f32 %v224, %v832
    %v849 = vmul.f32 %v225, %v833
    %v850 = vmul.f32 %v226, %v834
    %v851 = vmul.f32 %v227, %v835
    %v852 = vadd.f32 %v844, %v268
    %v853 = vadd.f32 %v845, %v269
    %v854 = vadd.f32 %v846, %v270
    %v855 = vadd.f32 %v847, %v271
    %v856 = vadd.f32 %v848, %v272
    %v857 = vadd.f32 %v849, %v273
    %v858 = vadd.f32 %v850, %v274
    %v859 = vadd.f32 %v851, %v275
    %v868 = vrot.slane %v852, 7
    %v869 = vrot.slane %v853, 7
    %v870 = vrot.slane %v854, 7
    %v871 = vrot.slane %v855, 7
    %v872 = vrot.slane %v856, 7
    %v873 = vrot.slane %v857, 7
    %v874 = vrot.slane %v858, 7
    %v875 = vrot.slane %v859, 7
    %v884 = vmul.f32 %v220, %v868
    %v885 = vmul.f32 %v221, %v869
    %v886 = vmul.f32 %v222, %v870
    %v887 = vmul.f32 %v223, %v871
    %v888 = vmul.f32 %v224, %v872
    %v889 = vmul.f32 %v225, %v873
    %v890 = vmul.f32 %v226, %v874
    %v891 = vmul.f32 %v227, %v875
    %v892 = vadd.f32 %v884, %v268
    %v893 = vadd.f32 %v885, %v269
    %v894 = vadd.f32 %v886, %v270
    %v895 = vadd.f32 %v887, %v271
    %v896 = vadd.f32 %v888, %v272
    %v897 = vadd.f32 %v889, %v273
    %v898 = vadd.f32 %v890, %v274
    %v899 = vadd.f32 %v891, %v275
    %v900 = vld [vmem:[%s3] sm:$0xff]
    %v901 = vld [vmem:[%s3 + $0x8] sm:$0xff]
    %v902 = vld [vmem:[%s3 + $0x10] sm:$0xff]
    %v903 = vld [vmem:[%s3 + $0x18] sm:$0xff]
    %v904 = vld [vmem:[%s4] sm:$0x1]
    %v906 = vlaneseq
    %v907 = vshrl.u32 %v906, 7
    %v908 = vsub.s32 0, %v907
    %v909 = vrot.slane %v904, %v908
    %v919 = vrot.slane %v892, 7
    %v920 = vrot.slane %v893, 6
    %vm921 = vcmask 1041409
    %v922 = vsel %vm921, %v920, %v919
    %v923 = vrot.slane %v894, 5
    %vm924 = vcmask 1042434
    %v925 = vsel %vm924, %v923, %v922
    %v926 = vrot.slane %v895, 4
    %vm927 = vcmask 1043459
    %v928 = vsel %vm927, %v926, %v925
    %v929 = vrot.slane %v896, 3
    %vm930 = vcmask 1044484
    %v931 = vsel %vm930, %v929, %v928
    %v932 = vrot.slane %v897, 2
    %vm933 = vcmask 1045509
    %v934 = vsel %vm933, %v932, %v931
    %v935 = vrot.slane %v898, 1
    %vm936 = vcmask 1046534
    %v937 = vsel %vm936, %v935, %v934
    %vm938 = vcmask 1047559
    %v939 = vsel %vm938, %v899, %v937
    %940 = vrot.lane.b32.xlu0 %v939, 32
    %v941 = vpop.permute.xlu0 %940
    %v942 = vsel %vm42, %v941, 0
    %944 = vmatprep.subr.mxu0 0.0
    %945 = vmatpush1.msra.mxu0 0.0
    %946 = vmatprep.subr.mxu0 0.0
    %947 = vmatpush1.msra.mxu0 0.0
    %948 = vmatprep.subr.mxu0 0.0
    %949 = vmatpush1.msra.mxu0 0.0
    %950 = vmatprep.subr.mxu0 0.0
    %951 = vmatpush1.msra.mxu0 0.0
    %952 = vmatprep.subr.mxu0 0.0
    %953 = vmatpush1.msra.mxu0 0.0
    %954 = vmatprep.subr.mxu0 0.0
    %955 = vmatpush1.msra.mxu0 0.0
    %956 = vmatprep.subr.mxu0 0.0
    %957 = vmatpush1.msra.mxu0 0.0
    %958 = vmatprep.subr.mxu0 0.0
    %959 = vmatpush1.msra.mxu0 0.0
    %960 = vmatprep.subr.mxu0 0.0
    %961 = vmatpush1.msra.mxu0 0.0
    %962 = vmatprep.subr.mxu0 0.0
    %963 = vmatpush1.msra.mxu0 0.0
    %964 = vmatprep.subr.mxu0 0.0
    %965 = vmatpush1.msra.mxu0 0.0
    %966 = vmatprep.subr.mxu0 0.0
    %967 = vmatpush1.msra.mxu0 0.0
    %968 = vmatprep.subr.mxu0 0.0
    %969 = vmatpush1.msra.mxu0 %v903
    %970 = vmatprep.subr.mxu0 0.0
    %971 = vmatpush1.msra.mxu0 %v902
    %972 = vmatprep.subr.mxu0 0.0
    %973 = vmatpush1.msra.mxu0 %v901
    %974 = vmatprep.subr.mxu0 0.0
    %975 = vmatpush1.msra.mxu0 %v900
    %976 = vmatprep.subr.mxu0 0.0
    %977 = vmatpush2.msra.mxu0 0.0
    %978 = vmatprep.subr.mxu0 0.0
    %979 = vmatpush2.msra.mxu0 0.0
    %980 = vmatprep.subr.mxu0 0.0
    %981 = vmatpush2.msra.mxu0 0.0
    %982 = vmatprep.subr.mxu0 0.0
    %983 = vmatpush2.msra.mxu0 0.0
    %984 = vmatprep.subr.mxu0 0.0
    %985 = vmatpush2.msra.mxu0 0.0
    %986 = vmatprep.subr.mxu0 0.0
    %987 = vmatpush2.msra.mxu0 0.0
    %988 = vmatprep.subr.mxu0 0.0
    %989 = vmatpush2.msra.mxu0 0.0
    %990 = vmatprep.subr.mxu0 0.0
    %991 = vmatpush2.msra.mxu0 0.0
    %992 = vmatprep.subr.mxu0 0.0
    %993 = vmatpush2.msra.mxu0 0.0
    %994 = vmatprep.subr.mxu0 0.0
    %995 = vmatpush2.msra.mxu0 0.0
    %996 = vmatprep.subr.mxu0 0.0
    %997 = vmatpush2.msra.mxu0 0.0
    %998 = vmatprep.subr.mxu0 0.0
    %999 = vmatpush2.msra.mxu0 0.0
    %1000 = vmatprep.subr.mxu0 0.0
    %1001 = vmatpush2.msra.mxu0 0.0
    %1002 = vmatprep.subr.mxu0 0.0
    %1003 = vmatpush2.msra.mxu0 0.0
    %1004 = vmatprep.subr.mxu0 0.0
    %1005 = vmatpush2.msra.mxu0 0.0
    %1006 = vmatprep.subr.mxu0 0.0
    %1007 = vmatpush2.msra.mxu0 0.0
    %1008 = vmatprep.mubr.f32.mxu0 0.0
    %1009 = vmatmul.mubr.f32.gmra.mxu0 %v942
    %v1010 = vpop.f32.mrf.mxu0
    %v1011 = vadd.f32 %v909, %v1010
    %v1012 = vpop.f32.mrf.mxu0
    %1013 = vdwg.mxu0
    %1014 = vst.msk [vmem:[#allocation2] sm:$0xff] %vm42, %v1011
    %v1015 = vxor.u32 %v1011, 2147483648
    %v1016 = vmul.f32 %v1015, 1.442695
    %v1017 = vpow.pop %v1016
    %v1018 = vadd.f32 %v1017, 1.0
    %v1019 = vrcp.pop %v1018
    %v1020 = vmul.f32 1.0, %v1019
    %1022 = vrot.lane.b32.xlu0 %v1020, 96
    %v1023 = vpop.permute.xlu0 %1022
    %vm1025 = vcmask 7168
    %1026 = vst.msk [vmem:[%s5] sm:$0xff] %vm1025, %v1023
    // Predicated region
    $region22: #{gru_model_forward.1} parent=1 // pred_check
      _
    $region23: #{gru_model_forward.1} parent=1 // pred_check_branch
      %1028 = sbr.rel (0) target = $region25
    $region24: #{gru_model_forward.1} parent=1 // pred_region
      _
    $region25: #{gru_model_forward.1} parent=1 // pred_fallthru
      _
    // Predicated region
    $region26: #{gru_model_forward.1} parent=1 // pred_check
      _
    $region27: #{gru_model_forward.1} parent=1 // pred_check_branch
      %1030 = sbr.rel (0) target = $region29
    $region28: #{gru_model_forward.1} parent=1 // pred_region
      %s1032 = ssub.s32 128, 128
      %1033 = vsyncadd [#allocation3], %s1032
      %s1035 = sshll.u32 [#allocation2], 4
      %s1036 = int_to_ptr.vmem [resolvable:$true] %s1035
      %1038 = dma.vmem_to_hbm [thread:$0]  %s1036, 128, %s6, [#allocation3]
    $region29: #{gru_model_forward.1} parent=1 // pred_fallthru
      _
    // Predicated region
    $region30: #{gru_model_forward.1} parent=1 // pred_check
      _
    $region31: #{gru_model_forward.1} parent=1 // pred_check_branch
      %1040 = sbr.rel (0) target = $region33
    $region32: #{gru_model_forward.1} parent=1 // pred_region
      _
    $region33: #{gru_model_forward.1} parent=1 // pred_fallthru
      _
    // Predicated region
    $region34: #{gru_model_forward.1} parent=1 // pred_check
      _
    $region35: #{gru_model_forward.1} parent=1 // pred_check_branch
      %1042 = sbr.rel (0) target = $region37
    $region36: #{gru_model_forward.1} parent=1 // pred_region
      %1043 = dma.done [#allocation3], 128
    $region37: #{gru_model_forward.1} parent=1 // pred_fallthru
      _
    %1044 = vsyncpa [#allocation3], 1

</llo_original>
